<compile_context>
chip_gen: v5e
topology: v5e:2x2
jax: 0.10.0
libtpu: 0.0.40
codegen_flags: <defaults>
</compile_context>

<pallas_src>
import numpy as np
import jax
import jax.numpy as jnp
from jax.experimental import pallas as pl
from jax.experimental.pallas import tpu as pltpu


# ---------------------------------------------------------------------------
# Pallas kernel: matmul -> bias -> ReLU -> matmul, accumulated over d_ff chunks
# ---------------------------------------------------------------------------

def _ffn_kernel(x_ref, w1t_ref, b1_ref, w2t_ref, b2_ref, o_ref, acc_ref):
    j = pl.program_id(1)  # d_ff-chunk (reduction) axis, last in the grid

    @pl.when(j == 0)
    def _():
        acc_ref[...] = jnp.zeros_like(acc_ref)

    compute_dtype = w1t_ref.dtype
    # Cast activations to the compute dtype inside the kernel (no wrapper-side pass).
    x = x_ref[...].astype(compute_dtype)
    # First projection chunk: MXU matmul with f32 accumulation.
    h = jnp.dot(x, w1t_ref[...], preferred_element_type=jnp.float32)
    # bias1 + ReLU are elementwise along d_ff, hence chunk-local.  Do them in the
    # compute dtype (the second MXU consumes that dtype anyway).
    h = jnp.maximum(h.astype(compute_dtype) + b1_ref[...], 0)
    # Second projection chunk: accumulate into the f32 scratch.
    acc_ref[...] += jnp.dot(h, w2t_ref[...], preferred_element_type=jnp.float32)

    @pl.when(j == pl.num_programs(1) - 1)
    def _():
        o_ref[...] = (acc_ref[...] + b2_ref[...]).astype(o_ref.dtype)


# ---------------------------------------------------------------------------
# VMEM accounting / tile selection (generation aware, consistent with vmem_limit)
# ---------------------------------------------------------------------------

_INTERNAL_SCRATCH_SLACK = 8 * 1024 * 1024  # Mosaic-internal scratch headroom


def _tpu_vmem_bytes():
    try:
        return int(pltpu.get_tpu_info().vmem_capacity_bytes)
    except Exception:
        return 64 * 1024 * 1024  # conservative fallback (v7x per-TC physical VMEM)


def _round_rows(tm, M):
    """MXU-friendly row-tile alignment (256 on v6e/v7x, also a 128-multiple for v5e)."""
    tm = int(tm)
    if tm >= M:
        return M
    if tm >= 256:
        return (tm // 256) * 256
    return max(8, (tm // 8) * 8)


def _vmem_usage(tm, D, dff_tile, x_itemsize, out_itemsize, w_itemsize):
    use = 0
    use += 2 * tm * D * x_itemsize            # streamed x block (double-buffered)
    use += 2 * tm * D * out_itemsize          # streamed out block (double-buffered)
    use += 2 * D * dff_tile * w_itemsize      # w1^T chunk (double-buffered)
    use += 2 * dff_tile * w_itemsize          # b1 chunk
    use += 2 * dff_tile * D * w_itemsize      # w2^T chunk (double-buffered)
    use += 2 * D * 4                          # b2 (f32)
    use += tm * D * 4                         # f32 accumulator scratch
    use += tm * dff_tile * (4 + w_itemsize)   # live hidden: f32 dot result + cast copy
    return use


def _select_tiles(M, D, dff, x_itemsize, out_itemsize, w_itemsize, budget):
    """Pick (row_tile, dff_tile) that fit the same budget handed to the compiler."""
    tm_probe = _round_rows(min(256, M), M)
    # d_ff chunks must divide d_ff exactly (no padded weight columns may leak into
    # the accumulation) and stay lane-dense (multiple of 128) when < d_ff.
    candidates = [dff] + [dff // s for s in range(2, dff + 1)
                          if dff % s == 0 and (dff // s) % 128 == 0]
    dff_tile = candidates[-1]
    for c in candidates:
        if _vmem_usage(tm_probe, D, c, x_itemsize, out_itemsize, w_itemsize) <= budget:
            dff_tile = c
            break

    fixed = (2 * D * dff_tile * w_itemsize + 2 * dff_tile * w_itemsize
             + 2 * dff_tile * D * w_itemsize + 2 * D * 4)
    per_row = (2 * D * x_itemsize + 2 * D * out_itemsize + D * 4
               + dff_tile * (4 + w_itemsize))
    tm = (budget - fixed) // max(per_row, 1)
    tm = _round_rows(max(8, min(tm, 1024, M)), M)
    return tm, dff_tile


# ---------------------------------------------------------------------------
# Parameter handling
# ---------------------------------------------------------------------------

def init_ffn_params(key, d_model, d_ff):
    """Raw f32 parameters in PyTorch Conv1d(k=1) layout (kernel dim squeezed)."""
    k1, k2, k3, k4 = jax.random.split(key, 4)
    s1 = 1.0 / np.sqrt(d_model)
    s2 = 1.0 / np.sqrt(d_ff)
    return {
        "w1": s1 * jax.random.normal(k1, (d_ff, d_model), jnp.float32),  # conv1.weight
        "b1": s1 * jax.random.normal(k2, (d_ff,), jnp.float32),          # conv1.bias
        "w2": s2 * jax.random.normal(k3, (d_model, d_ff), jnp.float32),  # conv2.weight
        "b2": s2 * jax.random.normal(k4, (d_model,), jnp.float32),       # conv2.bias
    }


def prepare_ffn_params(raw, compute_dtype=jnp.bfloat16):
    """One-time layout prep: pre-transpose to (D_in, D_out), pre-cast weights.

    bf16 weights + f32 MXU accumulation is the only production path; bias2 stays f32
    because the finalize add happens on the f32 accumulator.
    """
    d_ff, d_model = raw["w1"].shape
    return {
        "w1t": raw["w1"].T.astype(compute_dtype),              # (d_model, d_ff)
        "b1": raw["b1"].reshape(1, d_ff).astype(compute_dtype),
        "w2t": raw["w2"].T.astype(compute_dtype),               # (d_ff, d_model)
        "b2": raw["b2"].reshape(1, d_model).astype(jnp.float32),
    }


# ---------------------------------------------------------------------------
# Forward wrapper
# ---------------------------------------------------------------------------

def poswise_ffn_forward(x, prep, *, row_tile=None, dff_tile=None):
    """PoswiseFFN forward.  x: (B, L, d_model) -> (B, L, d_model), same dtype as x."""
    B, L, D = x.shape
    w1t, b1, w2t, b2 = prep["w1t"], prep["b1"], prep["w2t"], prep["b2"]
    dff = w1t.shape[1]
    w_itemsize = jnp.dtype(w1t.dtype).itemsize
    x_itemsize = jnp.dtype(x.dtype).itemsize
    out_dtype = x.dtype
    out_itemsize = jnp.dtype(out_dtype).itemsize

    M = B * L
    xm = x.reshape(M, D)  # free reshape, NO dtype cast here (cast is in-kernel)

    phys_vmem = _tpu_vmem_bytes()
    vmem_limit = int(phys_vmem * 0.85)
    budget = vmem_limit - _INTERNAL_SCRATCH_SLACK

    tm_auto, dt_auto = _select_tiles(M, D, dff, x_itemsize, out_itemsize,
                                     w_itemsize, budget)
    tm = tm_auto if row_tile is None else _round_rows(row_tile, M)
    dt = dt_auto if dff_tile is None else int(dff_tile)
    if dff % dt != 0:
        raise ValueError(f"dff_tile={dt} must divide d_ff={dff} exactly")
    if dt < dff and dt % 128 != 0:
        raise ValueError(f"dff_tile={dt} must be a multiple of 128 (lane width)")

    grid = (pl.cdiv(M, tm), dff // dt)

    cost = pl.CostEstimate(
        flops=4 * M * D * dff,
        transcendentals=0,
        bytes_accessed=(M * D * (x_itemsize + out_itemsize)
                        + 2 * D * dff * w_itemsize
                        + (dff + D) * 4),
    )

    out = pl.pallas_call(
        _ffn_kernel,
        out_shape=jax.ShapeDtypeStruct((M, D), out_dtype),
        grid=grid,
        in_specs=[
            pl.BlockSpec((tm, D), lambda i, j: (i, 0)),    # x rows: streamed over i
            pl.BlockSpec((D, dt), lambda i, j: (0, j)),    # w1^T chunk: streamed over j
            pl.BlockSpec((1, dt), lambda i, j: (0, j)),    # b1 chunk
            pl.BlockSpec((dt, D), lambda i, j: (j, 0)),    # w2^T chunk: streamed over j
            pl.BlockSpec((1, D), lambda i, j: (0, 0)),     # b2: grid-invariant
        ],
        out_specs=pl.BlockSpec((tm, D), lambda i, j: (i, 0)),  # resident across j
        scratch_shapes=[pltpu.VMEM((tm, D), jnp.float32)],     # f32 accumulator
        compiler_params=pltpu.CompilerParams(
            dimension_semantics=("parallel", "arbitrary"),
            vmem_limit_bytes=vmem_limit,
        ),
        cost_estimate=cost,
    )(xm, w1t, b1, w2t, b2)

    # Dropout(p=0.0) is identity.
    return out.reshape(B, L, D)


# ---------------------------------------------------------------------------
# Pure-JAX reference (PyTorch semantics)
# ---------------------------------------------------------------------------

def ffn_reference(x, raw):
    # conv1(X.transpose(1,2)) with k=1  ==  x @ w1^T + b1, per position.
    h = jnp.einsum("bld,fd->blf", x, raw["w1"]) + raw["b1"]
    h = jnp.maximum(h, 0.0)
    out = jnp.einsum("blf,df->bld", h, raw["w2"]) + raw["b2"]
    return out


# ---------------------------------------------------------------------------
# main
# ---------------------------------------------------------------------------

if __name__ == "__main__":
    # Lane-dense demo sizes (multiples of 128), still small.
    d_model = 128
    d_ff = 256
    B = 2
    L = 64   # M = B * L = 128 flattened positions

    key = jax.random.PRNGKey(0)
    k_w, k_x = jax.random.split(key)

    raw = init_ffn_params(k_w, d_model, d_ff)
    x = jax.random.normal(k_x, (B, L, d_model), jnp.float32)

    ref = ffn_reference(x, raw)
    prep = prepare_ffn_params(raw)  # bf16 weights, f32 MXU accumulation

    # 1) Auto-selected tiles (single d_ff chunk at this size; weights VMEM-resident).
    out_auto = jax.block_until_ready(poswise_ffn_forward(x, prep))

    # 2) Forced small tiles to exercise the pipelined row grid AND the d_ff-split
    #    accumulator path: grid = (2 row tiles, 2 d_ff chunks).
    out_tiled = jax.block_until_ready(
        poswise_ffn_forward(x, prep, row_tile=64, dff_tile=128))

    assert out_auto.shape == (B, L, d_model), out_auto.shape
    assert out_tiled.shape == (B, L, d_model), out_tiled.shape
    assert bool(jnp.all(jnp.isfinite(out_auto)))
    assert bool(jnp.all(jnp.isfinite(out_tiled)))
    assert bool(jnp.allclose(out_auto, ref, rtol=6e-2, atol=6e-2)), "auto-tile mismatch"
    assert bool(jnp.allclose(out_tiled, ref, rtol=6e-2, atol=6e-2)), "dff-split mismatch"

    print("KERNEL_OK")
</pallas_src>

<mosaic_0001>
module attributes {stable_mosaic.version = 11 : i64} {
  func.func @_ffn_kernel(%arg0: i32, %arg1: i32, %arg2: memref<128x128xf32, #tpu.memory_space<vmem>>, %arg3: memref<128x256xbf16, #tpu.memory_space<vmem>>, %arg4: memref<1x256xbf16, #tpu.memory_space<vmem>>, %arg5: memref<256x128xbf16, #tpu.memory_space<vmem>>, %arg6: memref<1x128xf32, #tpu.memory_space<vmem>>, %arg7: memref<128x128xf32, #tpu.memory_space<vmem>>, %arg8: memref<128x128xf32, #tpu.memory_space<vmem>>) attributes {dimension_semantics = [#tpu.dimension_semantics<parallel>, #tpu.dimension_semantics<arbitrary>], iteration_bounds = array<i64: 1, 1>, scalar_prefetch = 0 : i64, scratch_operands = 1 : i64, tpu.core_type = #tpu.core_type<tc>, window_params = [{transform_indices = @transform_0, window_bounds = array<i64: 128, 128>}, {transform_indices = @transform_1, window_bounds = array<i64: 128, 256>}, {transform_indices = @transform_2, window_bounds = array<i64: 1, 256>}, {transform_indices = @transform_3, window_bounds = array<i64: 256, 128>}, {pipeline_mode = #tpu.pipeline_mode<synchronous>, transform_indices = @transform_4, window_bounds = array<i64: 1, 128>}, {transform_indices = @transform_5, window_bounds = array<i64: 128, 128>}]} {
    %c0_i32 = arith.constant 0 : i32
    %0 = arith.cmpi eq, %arg1, %c0_i32 : i32
    %1 = arith.extui %0 : i1 to i32
    %c0_i32_0 = arith.constant 0 : i32
    %2 = arith.cmpi ne, %1, %c0_i32_0 : i32
    scf.if %2 {
      %cst_16 = arith.constant 0.000000e+00 : f32
      %21 = vector.broadcast %cst_16 : f32 to vector<128x128xf32>
      %c0_17 = arith.constant 0 : index
      %c0_18 = arith.constant 0 : index
      %22 = vector.load %arg8[%c0_17, %c0_18] : memref<128x128xf32, #tpu.memory_space<vmem>>, vector<128x128xf32>
      tpu.vector_store %arg8[%c0_17, %c0_18], %21 {strides = array<i32>} : memref<128x128xf32, #tpu.memory_space<vmem>>, vector<128x128xf32>,
    } else {
    }
    %c0 = arith.constant 0 : index
    %c0_1 = arith.constant 0 : index
    %3 = vector.load %arg2[%c0, %c0_1] : memref<128x128xf32, #tpu.memory_space<vmem>>, vector<128x128xf32>
    %4 = arith.truncf %3 : vector<128x128xf32> to vector<128x128xbf16>
    %c0_2 = arith.constant 0 : index
    %c0_3 = arith.constant 0 : index
    %5 = vector.load %arg3[%c0_2, %c0_3] : memref<128x256xbf16, #tpu.memory_space<vmem>>, vector<128x256xbf16>
    %cst = arith.constant dense<0.000000e+00> : vector<128x256xf32>
    %6 = tpu.matmul %4, %5, %cst {dimension_numbers = #tpu.dot_dimension_numbers<[1], [0], [0], [1], [0, 0, 1, 1], [], []>} : vector<128x128xbf16>, vector<128x256xbf16>, vector<128x256xf32> -> vector<128x256xf32>
    %7 = arith.truncf %6 : vector<128x256xf32> to vector<128x256xbf16>
    %c0_4 = arith.constant 0 : index
    %c0_5 = arith.constant 0 : index
    %8 = vector.load %arg4[%c0_4, %c0_5] : memref<1x256xbf16, #tpu.memory_space<vmem>>, vector<1x256xbf16>
    %9 = vector.broadcast %8 : vector<1x256xbf16> to vector<128x256xbf16>
    %10 = arith.addf %7, %9 : vector<128x256xbf16>
    %cst_6 = arith.constant 0.000000e+00 : bf16
    %11 = vector.broadcast %cst_6 : bf16 to vector<128x256xbf16>
    %12 = arith.maximumf %10, %11 : vector<128x256xbf16>
    %c0_7 = arith.constant 0 : index
    %c0_8 = arith.constant 0 : index
    %13 = vector.load %arg8[%c0_7, %c0_8] : memref<128x128xf32, #tpu.memory_space<vmem>>, vector<128x128xf32>
    %c0_9 = arith.constant 0 : index
    %c0_10 = arith.constant 0 : index
    %14 = vector.load %arg5[%c0_9, %c0_10] : memref<256x128xbf16, #tpu.memory_space<vmem>>, vector<256x128xbf16>
    %cst_11 = arith.constant dense<0.000000e+00> : vector<128x128xf32>
    %15 = tpu.matmul %12, %14, %cst_11 {dimension_numbers = #tpu.dot_dimension_numbers<[1], [0], [0], [1], [0, 0, 1, 1], [], []>} : vector<128x256xbf16>, vector<256x128xbf16>, vector<128x128xf32> -> vector<128x128xf32>
    %16 = arith.addf %13, %15 : vector<128x128xf32>
    %c0_12 = arith.constant 0 : index
    %c0_13 = arith.constant 0 : index
    %17 = vector.load %arg8[%c0_12, %c0_13] : memref<128x128xf32, #tpu.memory_space<vmem>>, vector<128x128xf32>
    tpu.vector_store %arg8[%c0_12, %c0_13], %16 {strides = array<i32>} : memref<128x128xf32, #tpu.memory_space<vmem>>, vector<128x128xf32>,
    %c0_i32_14 = arith.constant 0 : i32
    %18 = arith.cmpi eq, %arg1, %c0_i32_14 : i32
    %19 = arith.extui %18 : i1 to i32
    %c0_i32_15 = arith.constant 0 : i32
    %20 = arith.cmpi ne, %19, %c0_i32_15 : i32
    scf.if %20 {
      %c0_16 = arith.constant 0 : index
      %c0_17 = arith.constant 0 : index
      %21 = vector.load %arg8[%c0_16, %c0_17] : memref<128x128xf32, #tpu.memory_space<vmem>>, vector<128x128xf32>
      %c0_18 = arith.constant 0 : index
      %c0_19 = arith.constant 0 : index
      %22 = vector.load %arg6[%c0_18, %c0_19] : memref<1x128xf32, #tpu.memory_space<vmem>>, vector<1x128xf32>
      %23 = vector.broadcast %22 : vector<1x128xf32> to vector<128x128xf32>
      %24 = arith.addf %21, %23 : vector<128x128xf32>
      %c0_20 = arith.constant 0 : index
      %c0_21 = arith.constant 0 : index
      %25 = vector.load %arg7[%c0_20, %c0_21] : memref<128x128xf32, #tpu.memory_space<vmem>>, vector<128x128xf32>
      tpu.vector_store %arg7[%c0_20, %c0_21], %24 {strides = array<i32>} : memref<128x128xf32, #tpu.memory_space<vmem>>, vector<128x128xf32>,
    } else {
    }
    return
  }
  func.func @transform_0(%arg0: i32, %arg1: i32) -> (i32, i32) {
    %c0_i32 = arith.constant 0 : i32
    %c0_i32_0 = arith.constant 0 : i32
    return %arg0, %c0_i32 : i32, i32
  }
  func.func @transform_1(%arg0: i32, %arg1: i32) -> (i32, i32) {
    %c0_i32 = arith.constant 0 : i32
    %c0_i32_0 = arith.constant 0 : i32
    return %c0_i32, %arg1 : i32, i32
  }
  func.func @transform_2(%arg0: i32, %arg1: i32) -> (i32, i32) {
    %c0_i32 = arith.constant 0 : i32
    %c0_i32_0 = arith.constant 0 : i32
    return %c0_i32, %arg1 : i32, i32
  }
  func.func @transform_3(%arg0: i32, %arg1: i32) -> (i32, i32) {
    %c0_i32 = arith.constant 0 : i32
    %c0_i32_0 = arith.constant 0 : i32
    return %arg1, %c0_i32 : i32, i32
  }
  func.func @transform_4(%arg0: i32, %arg1: i32) -> (i32, i32) {
    %c0_i32 = arith.constant 0 : i32
    %c0_i32_0 = arith.constant 0 : i32
    %c0_i32_1 = arith.constant 0 : i32
    return %c0_i32, %c0_i32_0 : i32, i32
  }
  func.func @transform_5(%arg0: i32, %arg1: i32) -> (i32, i32) {
    %c0_i32 = arith.constant 0 : i32
    %c0_i32_0 = arith.constant 0 : i32
    return %arg0, %c0_i32 : i32, i32
  }
}

</mosaic_0001>

<llo_original>
// kernel: tpu_custom_call.1
$region0: #{tpu_custom_call.1}
  #allocation0 [shape = 'u32[]', space=smem, size = 0x4, offset = 0x4, fixed_abs, tag = 'smem constant byte address 0x4 - core index']
  #allocation1 [shape = 'u32[72,128]{1,0:T(1,128)}', space=vmem, size = 0x9000, scoped, tag = 'internal scratch']
  #allocation2 [shape = 'f32[128,128]{1,0:T(8,128)}', space=vmem, size = 0x10000, scoped, tag = 'scratch operand']
  %s0 = inlined_call_operand.hbm [shape: f32[128,128], index: 0, kind: input, shape index: {}]
  %s1 = inlined_call_operand.hbm [shape: bf16[128,256], index: 1, kind: input, shape index: {}]
  %s2 = inlined_call_operand.hbm [shape: bf16[1,256], index: 2, kind: input, shape index: {}]
  %s3 = inlined_call_operand.hbm [shape: bf16[256,128], index: 3, kind: input, shape index: {}]
  %s4 = inlined_call_operand.vmem [shape: f32[1,128], index: 4, kind: input, shape index: {}]
  %s5 = inlined_call_operand.hbm [shape: f32[128,128], index: 5, kind: output, shape index: {}]
  %s6 = sld [smem:[#allocation0]]
  $region54: #{tpu_custom_call.1} parent=0
    _
  %s8 = ssub.s32 1, %s6
  %s9 = scalar_select 0, %s8, %s6
  $region1: #{tpu_custom_call.1} parent=0
    #allocation3 [shape = 'u8[65536]{0}', space=vmem, size = 0x10000, scoped, tag = 'input window, operand 0, single buffered']
    #allocation4 [shape = 's32[1]{0}', space=sflag, size = 0x4, scoped, tag = 'scoped memory for tpu_custom_call.1']
    #allocation5 [shape = 's32[1]{0}', space=sflag, size = 0x4, scoped, tag = 'scoped memory for tpu_custom_call.1']
    #allocation6 [shape = 'u8[65536]{0}', space=vmem, size = 0x10000, scoped, tag = 'input window, operand 1, single buffered']
    #allocation7 [shape = 's32[1]{0}', space=sflag, size = 0x4, scoped, tag = 'scoped memory for tpu_custom_call.1']
    #allocation8 [shape = 'u8[1024]{0}', space=vmem, size = 0x400, scoped, tag = 'input window, operand 2, single buffered']
    #allocation9 [shape = 'u8[65536]{0}', space=vmem, size = 0x10000, scoped, tag = 'input window, operand 3, single buffered']
    #allocation10 [shape = 's32[1]{0}', space=sflag, size = 0x4, scoped, tag = 'scoped memory for tpu_custom_call.1']
    #allocation11 [shape = 'u8[65536]{0}', space=vmem, size = 0x10000, scoped, tag = 'output window, operand 0, single buffered']
    %10 = vsyncpa [#allocation4], 0
    %11 = vsyncpa [#allocation7], 0
    %12 = vsyncpa [#allocation10], 0
    %13 = vsyncpa [#allocation5], 0
    // Predicated region
    $region2: #{tpu_custom_call.1} parent=1 // pred_check
      _
    $region3: #{tpu_custom_call.1} parent=1 // pred_check_branch
      %15 = sbr.rel (0) target = $region5
    $region4: #{tpu_custom_call.1} parent=1 // pred_region
      %17 = vsyncadd [#allocation4], 0
      %s18 = sshll.u32 %s0, 4
      %s19 = int_to_ptr.hbm [resolvable:$true] %s18
      %s20 = sshll.u32 [#allocation3], 4
      %s21 = int_to_ptr.vmem [resolvable:$true] %s20
      %26 = dma.hbm_to_vmem [thread:$0]  %s19, 2048, %s21, [#allocation4], 128, 128, 8
    $region5: #{tpu_custom_call.1} parent=1 // pred_fallthru
      _
    // Predicated region
    $region6: #{tpu_custom_call.1} parent=1 // pred_check
      _
    $region7: #{tpu_custom_call.1} parent=1 // pred_check_branch
      %28 = sbr.rel (0) target = $region9
    $region8: #{tpu_custom_call.1} parent=1 // pred_region
      %30 = vsyncadd [#allocation7], 0
      %s31 = sshll.u32 %s1, 4
      %s32 = int_to_ptr.hbm [resolvable:$true] %s31
      %s33 = sshll.u32 [#allocation6], 4
      %s34 = int_to_ptr.vmem [resolvable:$true] %s33
      %39 = dma.hbm_to_vmem [thread:$0]  %s32, 2048, %s34, [#allocation7], 128, 128, 8
    $region9: #{tpu_custom_call.1} parent=1 // pred_fallthru
      _
    // Predicated region
    $region10: #{tpu_custom_call.1} parent=1 // pred_check
      _
    $region11: #{tpu_custom_call.1} parent=1 // pred_check_branch
      %41 = sbr.rel (0) target = $region13
    $region12: #{tpu_custom_call.1} parent=1 // pred_region
      %43 = vsyncadd [#allocation7], 0
      %s45 = sshll.u32 %s2, 4
      %s46 = int_to_ptr.hbm [resolvable:$true] %s45
      %s47 = sshll.u32 [#allocation8], 4
      %s48 = int_to_ptr.vmem [resolvable:$true] %s47
      %50 = dma.hbm_to_vmem [thread:$0]  %s46, 32, %s48, [#allocation7]
    $region13: #{tpu_custom_call.1} parent=1 // pred_fallthru
      _
    // Predicated region
    $region14: #{tpu_custom_call.1} parent=1 // pred_check
      _
    $region15: #{tpu_custom_call.1} parent=1 // pred_check_branch
      %52 = sbr.rel (0) target = $region17
    $region16: #{tpu_custom_call.1} parent=1 // pred_region
      %54 = vsyncadd [#allocation10], 0
      %s55 = sshll.u32 %s3, 4
      %s56 = int_to_ptr.hbm [resolvable:$true] %s55
      %s57 = sshll.u32 [#allocation9], 4
      %s58 = int_to_ptr.vmem [resolvable:$true] %s57
      %63 = dma.hbm_to_vmem [thread:$0]  %s56, 2048, %s58, [#allocation10], 64, 64, 4
    $region17: #{tpu_custom_call.1} parent=1 // pred_fallthru
      _
    // Predicated region
    $region18: #{tpu_custom_call.1} parent=1 // pred_check
      _
    $region19: #{tpu_custom_call.1} parent=1 // pred_check_branch
      %65 = sbr.rel (0) target = $region21
    $region20: #{tpu_custom_call.1} parent=1 // pred_region
      _
    $region21: #{tpu_custom_call.1} parent=1 // pred_fallthru
      _
    // Predicated region
    $region22: #{tpu_custom_call.1} parent=1 // pred_check
      _
    $region23: #{tpu_custom_call.1} parent=1 // pred_check_branch
      %67 = sbr.rel (0) target = $region25
    $region24: #{tpu_custom_call.1} parent=1 // pred_region
      %69 = dma.done [#allocation4], 2048
    $region25: #{tpu_custom_call.1} parent=1 // pred_fallthru
      _
    // Predicated region
    $region26: #{tpu_custom_call.1} parent=1 // pred_check
      _
    $region27: #{tpu_custom_call.1} parent=1 // pred_check_branch
      %71 = sbr.rel (0) target = $region29
    $region28: #{tpu_custom_call.1} parent=1 // pred_region
      %73 = dma.done [#allocation7], 2048
    $region29: #{tpu_custom_call.1} parent=1 // pred_fallthru
      _
    // Predicated region
    $region30: #{tpu_custom_call.1} parent=1 // pred_check
      _
    $region31: #{tpu_custom_call.1} parent=1 // pred_check_branch
      %75 = sbr.rel (0) target = $region33
    $region32: #{tpu_custom_call.1} parent=1 // pred_region
      %77 = dma.done [#allocation7], 32
    $region33: #{tpu_custom_call.1} parent=1 // pred_fallthru
      _
    // Predicated region
    $region34: #{tpu_custom_call.1} parent=1 // pred_check
      _
    $region35: #{tpu_custom_call.1} parent=1 // pred_check_branch
      %79 = sbr.rel (0) target = $region37
    $region36: #{tpu_custom_call.1} parent=1 // pred_region
      %81 = dma.done [#allocation10], 2048
    $region37: #{tpu_custom_call.1} parent=1 // pred_fallthru
      _
    %p82 = scmp.eq.s32.totalorder 0, 0
    // Predicated region
    $region38: #{tpu_custom_call.1} parent=1 // pred_check
      %p83 = pneg %p82
    $region39: #{tpu_custom_call.1} parent=1 // pred_check_branch
      %85 = sbr.rel (%p83) target = $region41
    $region40: #{tpu_custom_call.1} parent=1 // pred_region
      %86 = vst [vmem:[#allocation2] sm:$0xff] 0.0
      %87 = vst [vmem:[#allocation2 + $0x8] sm:$0xff] 0.0
      %88 = vst [vmem:[#allocation2 + $0x10] sm:$0xff] 0.0
      %89 = vst [vmem:[#allocation2 + $0x18] sm:$0xff] 0.0
      %90 = vst [vmem:[#allocation2 + $0x20] sm:$0xff] 0.0
      %91 = vst [vmem:[#allocation2 + $0x28] sm:$0xff] 0.0
      %92 = vst [vmem:[#allocation2 + $0x30] sm:$0xff] 0.0
      %93 = vst [vmem:[#allocation2 + $0x38] sm:$0xff] 0.0
      %94 = vst [vmem:[#allocation2 + $0x40] sm:$0xff] 0.0
      %95 = vst [vmem:[#allocation2 + $0x48] sm:$0xff] 0.0
      %96 = vst [vmem:[#allocation2 + $0x50] sm:$0xff] 0.0
      %97 = vst [vmem:[#allocation2 + $0x58] sm:$0xff] 0.0
      %98 = vst [vmem:[#allocation2 + $0x60] sm:$0xff] 0.0
      %99 = vst [vmem:[#allocation2 + $0x68] sm:$0xff] 0.0
      %100 = vst [vmem:[#allocation2 + $0x70] sm:$0xff] 0.0
      %101 = vst [vmem:[#allocation2 + $0x78] sm:$0xff] 0.0
    $region41: #{tpu_custom_call.1} parent=1 // pred_fallthru
      _
    %v102 = vld [vmem:[#allocation3] sm:$0xff]
    %v103 = vld [vmem:[#allocation3 + $0x8] sm:$0xff]
    %v104 = vld [vmem:[#allocation3 + $0x10] sm:$0xff]
    %v105 = vld [vmem:[#allocation3 + $0x18] sm:$0xff]
    %v106 = vld [vmem:[#allocation3 + $0x20] sm:$0xff]
    %v107 = vld [vmem:[#allocation3 + $0x28] sm:$0xff]
    %v108 = vld [vmem:[#allocation3 + $0x30] sm:$0xff]
    %v109 = vld [vmem:[#allocation3 + $0x38] sm:$0xff]
    %v110 = vld [vmem:[#allocation3 + $0x40] sm:$0xff]
    %v111 = vld [vmem:[#allocation3 + $0x48] sm:$0xff]
    %v112 = vld [vmem:[#allocation3 + $0x50] sm:$0xff]
    %v113 = vld [vmem:[#allocation3 + $0x58] sm:$0xff]
    %v114 = vld [vmem:[#allocation3 + $0x60] sm:$0xff]
    %v115 = vld [vmem:[#allocation3 + $0x68] sm:$0xff]
    %v116 = vld [vmem:[#allocation3 + $0x70] sm:$0xff]
    %v117 = vld [vmem:[#allocation3 + $0x78] sm:$0xff]
    %v118 = vpack.c.bf16 %v103, %v102
    %v119 = vpack.c.bf16 %v105, %v104
    %v120 = vpack.c.bf16 %v107, %v106
    %v121 = vpack.c.bf16 %v109, %v108
    %v122 = vpack.c.bf16 %v111, %v110
    %v123 = vpack.c.bf16 %v113, %v112
    %v124 = vpack.c.bf16 %v115, %v114
    %v125 = vpack.c.bf16 %v117, %v116
    %v126 = vld [vmem:[#allocation6] sm:$0xff]
    %v127 = vld [vmem:[#allocation6 + $0x8] sm:$0xff]
    %v128 = vld [vmem:[#allocation6 + $0x10] sm:$0xff]
    %v129 = vld [vmem:[#allocation6 + $0x18] sm:$0xff]
    %v130 = vld [vmem:[#allocation6 + $0x20] sm:$0xff]
    %v131 = vld [vmem:[#allocation6 + $0x28] sm:$0xff]
    %v132 = vld [vmem:[#allocation6 + $0x30] sm:$0xff]
    %v133 = vld [vmem:[#allocation6 + $0x38] sm:$0xff]
    %v134 = vld [vmem:[#allocation6 + $0x40] sm:$0xff]
    %v135 = vld [vmem:[#allocation6 + $0x48] sm:$0xff]
    %v136 = vld [vmem:[#allocation6 + $0x50] sm:$0xff]
    %v137 = vld [vmem:[#allocation6 + $0x58] sm:$0xff]
    %v138 = vld [vmem:[#allocation6 + $0x60] sm:$0xff]
    %v139 = vld [vmem:[#allocation6 + $0x68] sm:$0xff]
    %v140 = vld [vmem:[#allocation6 + $0x70] sm:$0xff]
    %v141 = vld [vmem:[#allocation6 + $0x78] sm:$0xff]
    %v158 = vunpack.c.l.b16 %v126
    %v159 = vunpack.c.h.b16 %v126
    %v160 = vunpack.c.l.b16 %v127
    %v161 = vunpack.c.h.b16 %v127
    %v162 = vunpack.c.l.b16 %v128
    %v163 = vunpack.c.h.b16 %v128
    %v164 = vunpack.c.l.b16 %v129
    %v165 = vunpack.c.h.b16 %v129
    %v166 = vunpack.c.l.b16 %v130
    %v167 = vunpack.c.h.b16 %v130
    %v168 = vunpack.c.l.b16 %v131
    %v169 = vunpack.c.h.b16 %v131
    %v170 = vunpack.c.l.b16 %v132
    %v171 = vunpack.c.h.b16 %v132
    %v172 = vunpack.c.l.b16 %v133
    %v173 = vunpack.c.h.b16 %v133
    %v174 = vunpack.c.l.b16 %v134
    %v175 = vunpack.c.h.b16 %v134
    %v176 = vunpack.c.l.b16 %v135
    %v177 = vunpack.c.h.b16 %v135
    %v178 = vunpack.c.l.b16 %v136
    %v179 = vunpack.c.h.b16 %v136
    %v180 = vunpack.c.l.b16 %v137
    %v181 = vunpack.c.h.b16 %v137
    %v182 = vunpack.c.l.b16 %v138
    %v183 = vunpack.c.h.b16 %v138
    %v184 = vunpack.c.l.b16 %v139
    %v185 = vunpack.c.h.b16 %v139
    %v186 = vunpack.c.l.b16 %v140
    %v187 = vunpack.c.h.b16 %v140
    %v188 = vunpack.c.l.b16 %v141
    %v189 = vunpack.c.h.b16 %v141
    %v190 = vpack.c.b16 %v160, %v158
    %v191 = vpack.c.b16 %v161, %v159
    %v192 = vpack.c.b16 %v164, %v162
    %v193 = vpack.c.b16 %v165, %v163
    %v194 = vpack.c.b16 %v168, %v166
    %v195 = vpack.c.b16 %v169, %v167
    %v196 = vpack.c.b16 %v172, %v170
    %v197 = vpack.c.b16 %v173, %v171
    %v198 = vpack.c.b16 %v176, %v174
    %v199 = vpack.c.b16 %v177, %v175
    %v200 = vpack.c.b16 %v180, %v178
    %v201 = vpack.c.b16 %v181, %v179
    %v202 = vpack.c.b16 %v184, %v182
    %v203 = vpack.c.b16 %v185, %v183
    %v204 = vpack.c.b16 %v188, %v186
    %v205 = vpack.c.b16 %v189, %v187
    %222 = vmatpush.bf16.msra.mxu0 %v204
    %223 = vmatpush.bf16.msra.mxu0 %v202
    %224 = vmatpush.bf16.msra.mxu0 %v200
    %225 = vmatpush.bf16.msra.mxu0 %v198
    %226 = vmatpush.bf16.msra.mxu0 %v196
    %227 = vmatpush.bf16.msra.mxu0 %v194
    %228 = vmatpush.bf16.msra.mxu0 %v192
    %229 = vmatpush.bf16.msra.mxu0 %v190
    %230 = vmatmul.bf16.gmra.mxu0 %v118
    %v231 = vpop.f32.mrf.mxu0
    %v232 = vadd.f32 0.0, %v231
    %v233 = vpop.f32.mrf.mxu0
    %v234 = vadd.f32 0.0, %v233
    %235 = vmatmul.bf16.gmra.mxu0 %v119
    %v236 = vpop.f32.mrf.mxu0
    %v237 = vadd.f32 0.0, %v236
    %v238 = vpop.f32.mrf.mxu0
    %v239 = vadd.f32 0.0, %v238
    %240 = vmatmul.bf16.gmra.mxu0 %v120
    %v241 = vpop.f32.mrf.mxu0
    %v242 = vadd.f32 0.0, %v241
    %v243 = vpop.f32.mrf.mxu0
    %v244 = vadd.f32 0.0, %v243
    %245 = vmatmul.bf16.gmra.mxu0 %v121
    %v246 = vpop.f32.mrf.mxu0
    %v247 = vadd.f32 0.0, %v246
    %v248 = vpop.f32.mrf.mxu0
    %v249 = vadd.f32 0.0, %v248
    %250 = vmatmul.bf16.gmra.mxu0 %v122
    %v251 = vpop.f32.mrf.mxu0
    %v252 = vadd.f32 0.0, %v251
    %v253 = vpop.f32.mrf.mxu0
    %v254 = vadd.f32 0.0, %v253
    %255 = vmatmul.bf16.gmra.mxu0 %v123
    %v256 = vpop.f32.mrf.mxu0
    %v257 = vadd.f32 0.0, %v256
    %v258 = vpop.f32.mrf.mxu0
    %v259 = vadd.f32 0.0, %v258
    %260 = vmatmul.bf16.gmra.mxu0 %v124
    %v261 = vpop.f32.mrf.mxu0
    %v262 = vadd.f32 0.0, %v261
    %v263 = vpop.f32.mrf.mxu0
    %v264 = vadd.f32 0.0, %v263
    %265 = vmatmul.bf16.gmra.mxu0 %v125
    %v266 = vpop.f32.mrf.mxu0
    %v267 = vadd.f32 0.0, %v266
    %v268 = vpop.f32.mrf.mxu0
    %v269 = vadd.f32 0.0, %v268
    %270 = vdwg.mxu0
    %271 = vmatpush.bf16.msra.mxu0 %v205
    %272 = vmatpush.bf16.msra.mxu0 %v203
    %273 = vmatpush.bf16.msra.mxu0 %v201
    %274 = vmatpush.bf16.msra.mxu0 %v199
    %275 = vmatpush.bf16.msra.mxu0 %v197
    %276 = vmatpush.bf16.msra.mxu0 %v195
    %277 = vmatpush.bf16.msra.mxu0 %v193
    %278 = vmatpush.bf16.msra.mxu0 %v191
    %279 = vmatmul.bf16.gmra.mxu0 %v118
    %v280 = vpop.f32.mrf.mxu0
    %v281 = vadd.f32 0.0, %v280
    %v282 = vpop.f32.mrf.mxu0
    %v283 = vadd.f32 0.0, %v282
    %284 = vmatmul.bf16.gmra.mxu0 %v119
    %v285 = vpop.f32.mrf.mxu0
    %v286 = vadd.f32 0.0, %v285
    %v287 = vpop.f32.mrf.mxu0
    %v288 = vadd.f32 0.0, %v287
    %289 = vmatmul.bf16.gmra.mxu0 %v120
    %v290 = vpop.f32.mrf.mxu0
    %v291 = vadd.f32 0.0, %v290
    %v292 = vpop.f32.mrf.mxu0
    %v293 = vadd.f32 0.0, %v292
    %294 = vmatmul.bf16.gmra.mxu0 %v121
    %v295 = vpop.f32.mrf.mxu0
    %v296 = vadd.f32 0.0, %v295
    %v297 = vpop.f32.mrf.mxu0
    %v298 = vadd.f32 0.0, %v297
    %299 = vmatmul.bf16.gmra.mxu0 %v122
    %v300 = vpop.f32.mrf.mxu0
    %v301 = vadd.f32 0.0, %v300
    %v302 = vpop.f32.mrf.mxu0
    %v303 = vadd.f32 0.0, %v302
    %304 = vmatmul.bf16.gmra.mxu0 %v123
    %v305 = vpop.f32.mrf.mxu0
    %v306 = vadd.f32 0.0, %v305
    %v307 = vpop.f32.mrf.mxu0
    %v308 = vadd.f32 0.0, %v307
    %309 = vmatmul.bf16.gmra.mxu0 %v124
    %v310 = vpop.f32.mrf.mxu0
    %v311 = vadd.f32 0.0, %v310
    %v312 = vpop.f32.mrf.mxu0
    %v313 = vadd.f32 0.0, %v312
    %314 = vmatmul.bf16.gmra.mxu0 %v125
    %v315 = vpop.f32.mrf.mxu0
    %v316 = vadd.f32 0.0, %v315
    %v317 = vpop.f32.mrf.mxu0
    %v318 = vadd.f32 0.0, %v317
    %319 = vdwg.mxu0
    %v320 = vpack.c.bf16 %v281, %v232
    %v321 = vpack.c.bf16 %v283, %v234
    %v322 = vpack.c.bf16 %v286, %v237
    %v323 = vpack.c.bf16 %v288, %v239
    %v324 = vpack.c.bf16 %v291, %v242
    %v325 = vpack.c.bf16 %v293, %v244
    %v326 = vpack.c.bf16 %v296, %v247
    %v327 = vpack.c.bf16 %v298, %v249
    %v328 = vpack.c.bf16 %v301, %v252
    %v329 = vpack.c.bf16 %v303, %v254
    %v330 = vpack.c.bf16 %v306, %v257
    %v331 = vpack.c.bf16 %v308, %v259
    %v332 = vpack.c.bf16 %v311, %v262
    %v333 = vpack.c.bf16 %v313, %v264
    %v334 = vpack.c.bf16 %v316, %v267
    %v335 = vpack.c.bf16 %v318, %v269
    %v336 = vld [vmem:[#allocation8] sm:$0x3]
    %338 = vst [vmem:[#allocation1] ss:$9 sm:$0xff] %v336
    %v339 = vld [vmem:[#allocation1] sm:$0xff]
    %v340 = vld [vmem:[#allocation1 + $0x9] sm:$0xff]
    %v341 = vpack.i.b16 %v339, %v339
    %v343 = vperm.slane %v341, 0
    %v344 = vpack.i.b16 %v340, %v340
    %v346 = vperm.slane %v344, 0
    %v347 = vunpack.c.l.bf16 %v320
    %v348 = vunpack.c.h.bf16 %v320
    %v349 = vunpack.c.l.bf16 %v321
    %v350 = vunpack.c.h.bf16 %v321
    %v351 = vunpack.c.l.bf16 %v322
    %v352 = vunpack.c.h.bf16 %v322
    %v353 = vunpack.c.l.bf16 %v323
    %v354 = vunpack.c.h.bf16 %v323
    %v355 = vunpack.c.l.bf16 %v324
    %v356 = vunpack.c.h.bf16 %v324
    %v357 = vunpack.c.l.bf16 %v325
    %v358 = vunpack.c.h.bf16 %v325
    %v359 = vunpack.c.l.bf16 %v326
    %v360 = vunpack.c.h.bf16 %v326
    %v361 = vunpack.c.l.bf16 %v327
    %v362 = vunpack.c.h.bf16 %v327
    %v363 = vunpack.c.l.bf16 %v328
    %v364 = vunpack.c.h.bf16 %v328
    %v365 = vunpack.c.l.bf16 %v329
    %v366 = vunpack.c.h.bf16 %v329
    %v367 = vunpack.c.l.bf16 %v330
    %v368 = vunpack.c.h.bf16 %v330
    %v369 = vunpack.c.l.bf16 %v331
    %v370 = vunpack.c.h.bf16 %v331
    %v371 = vunpack.c.l.bf16 %v332
    %v372 = vunpack.c.h.bf16 %v332
    %v373 = vunpack.c.l.bf16 %v333
    %v374 = vunpack.c.h.bf16 %v333
    %v375 = vunpack.c.l.bf16 %v334
    %v376 = vunpack.c.h.bf16 %v334
    %v377 = vunpack.c.l.bf16 %v335
    %v378 = vunpack.c.h.bf16 %v335
    %v379 = vunpack.c.l.bf16 %v343
    %v380 = vunpack.c.l.bf16 %v346
    %v381 = vadd.f32 %v347, %v379
    %v382 = vadd.f32 %v348, %v380
    %v383 = vadd.f32 %v349, %v379
    %v384 = vadd.f32 %v350, %v380
    %v385 = vadd.f32 %v351, %v379
    %v386 = vadd.f32 %v352, %v380
    %v387 = vadd.f32 %v353, %v379
    %v388 = vadd.f32 %v354, %v380
    %v389 = vadd.f32 %v355, %v379
    %v390 = vadd.f32 %v356, %v380
    %v391 = vadd.f32 %v357, %v379
    %v392 = vadd.f32 %v358, %v380
    %v393 = vadd.f32 %v359, %v379
    %v394 = vadd.f32 %v360, %v380
    %v395 = vadd.f32 %v361, %v379
    %v396 = vadd.f32 %v362, %v380
    %v397 = vadd.f32 %v363, %v379
    %v398 = vadd.f32 %v364, %v380
    %v399 = vadd.f32 %v365, %v379
    %v400 = vadd.f32 %v366, %v380
    %v401 = vadd.f32 %v367, %v379
    %v402 = vadd.f32 %v368, %v380
    %v403 = vadd.f32 %v369, %v379
    %v404 = vadd.f32 %v370, %v380
    %v405 = vadd.f32 %v371, %v379
    %v406 = vadd.f32 %v372, %v380
    %v407 = vadd.f32 %v373, %v379
    %v408 = vadd.f32 %v374, %v380
    %v409 = vadd.f32 %v375, %v379
    %v410 = vadd.f32 %v376, %v380
    %v411 = vadd.f32 %v377, %v379
    %v412 = vadd.f32 %v378, %v380
    %v413 = vpack.c.bf16 %v382, %v381
    %v414 = vpack.c.bf16 %v384, %v383
    %v415 = vpack.c.bf16 %v386, %v385
    %v416 = vpack.c.bf16 %v388, %v387
    %v417 = vpack.c.bf16 %v390, %v389
    %v418 = vpack.c.bf16 %v392, %v391
    %v419 = vpack.c.bf16 %v394, %v393
    %v420 = vpack.c.bf16 %v396, %v395
    %v421 = vpack.c.bf16 %v398, %v397
    %v422 = vpack.c.bf16 %v400, %v399
    %v423 = vpack.c.bf16 %v402, %v401
    %v424 = vpack.c.bf16 %v404, %v403
    %v425 = vpack.c.bf16 %v406, %v405
    %v426 = vpack.c.bf16 %v408, %v407
    %v427 = vpack.c.bf16 %v410, %v409
    %v428 = vpack.c.bf16 %v412, %v411
    %v429 = vunpack.c.l.bf16 %v413
    %v430 = vunpack.c.h.bf16 %v413
    %v431 = vunpack.c.l.bf16 %v414
    %v432 = vunpack.c.h.bf16 %v414
    %v433 = vunpack.c.l.bf16 %v415
    %v434 = vunpack.c.h.bf16 %v415
    %v435 = vunpack.c.l.bf16 %v416
    %v436 = vunpack.c.h.bf16 %v416
    %v437 = vunpack.c.l.bf16 %v417
    %v438 = vunpack.c.h.bf16 %v417
    %v439 = vunpack.c.l.bf16 %v418
    %v440 = vunpack.c.h.bf16 %v418
    %v441 = vunpack.c.l.bf16 %v419
    %v442 = vunpack.c.h.bf16 %v419
    %v443 = vunpack.c.l.bf16 %v420
    %v444 = vunpack.c.h.bf16 %v420
    %v445 = vunpack.c.l.bf16 %v421
    %v446 = vunpack.c.h.bf16 %v421
    %v447 = vunpack.c.l.bf16 %v422
    %v448 = vunpack.c.h.bf16 %v422
    %v449 = vunpack.c.l.bf16 %v423
    %v450 = vunpack.c.h.bf16 %v423
    %v451 = vunpack.c.l.bf16 %v424
    %v452 = vunpack.c.h.bf16 %v424
    %v453 = vunpack.c.l.bf16 %v425
    %v454 = vunpack.c.h.bf16 %v425
    %v455 = vunpack.c.l.bf16 %v426
    %v456 = vunpack.c.h.bf16 %v426
    %v457 = vunpack.c.l.bf16 %v427
    %v458 = vunpack.c.h.bf16 %v427
    %v459 = vunpack.c.l.bf16 %v428
    %v460 = vunpack.c.h.bf16 %v428
    %v461 = vmax.f32 %v429, 0.0
    %v462 = vmax.f32 %v430, 0.0
    %v463 = vmax.f32 %v431, 0.0
    %v464 = vmax.f32 %v432, 0.0
    %v465 = vmax.f32 %v433, 0.0
    %v466 = vmax.f32 %v434, 0.0
    %v467 = vmax.f32 %v435, 0.0
    %v468 = vmax.f32 %v436, 0.0
    %v469 = vmax.f32 %v437, 0.0
    %v470 = vmax.f32 %v438, 0.0
    %v471 = vmax.f32 %v439, 0.0
    %v472 = vmax.f32 %v440, 0.0
    %v473 = vmax.f32 %v441, 0.0
    %v474 = vmax.f32 %v442, 0.0
    %v475 = vmax.f32 %v443, 0.0
    %v476 = vmax.f32 %v444, 0.0
    %v477 = vmax.f32 %v445, 0.0
    %v478 = vmax.f32 %v446, 0.0
    %v479 = vmax.f32 %v447, 0.0
    %v480 = vmax.f32 %v448, 0.0
    %v481 = vmax.f32 %v449, 0.0
    %v482 = vmax.f32 %v450, 0.0
    %v483 = vmax.f32 %v451, 0.0
    %v484 = vmax.f32 %v452, 0.0
    %v485 = vmax.f32 %v453, 0.0
    %v486 = vmax.f32 %v454, 0.0
    %v487 = vmax.f32 %v455, 0.0
    %v488 = vmax.f32 %v456, 0.0
    %v489 = vmax.f32 %v457, 0.0
    %v490 = vmax.f32 %v458, 0.0
    %v491 = vmax.f32 %v459, 0.0
    %v492 = vmax.f32 %v460, 0.0
    %v493 = vpack.c.bf16 %v463, %v461
    %v494 = vpack.c.bf16 %v464, %v462
    %v495 = vpack.c.bf16 %v467, %v465
    %v496 = vpack.c.bf16 %v468, %v466
    %v497 = vpack.c.bf16 %v471, %v469
    %v498 = vpack.c.bf16 %v472, %v470
    %v499 = vpack.c.bf16 %v475, %v473
    %v500 = vpack.c.bf16 %v476, %v474
    %v501 = vpack.c.bf16 %v479, %v477
    %v502 = vpack.c.bf16 %v480, %v478
    %v503 = vpack.c.bf16 %v483, %v481
    %v504 = vpack.c.bf16 %v484, %v482
    %v505 = vpack.c.bf16 %v487, %v485
    %v506 = vpack.c.bf16 %v488, %v486
    %v507 = vpack.c.bf16 %v491, %v489
    %v508 = vpack.c.bf16 %v492, %v490
    %v509 = vld [vmem:[#allocation2] sm:$0xff]
    %v510 = vld [vmem:[#allocation2 + $0x8] sm:$0xff]
    %v511 = vld [vmem:[#allocation2 + $0x10] sm:$0xff]
    %v512 = vld [vmem:[#allocation2 + $0x18] sm:$0xff]
    %v513 = vld [vmem:[#allocation2 + $0x20] sm:$0xff]
    %v514 = vld [vmem:[#allocation2 + $0x28] sm:$0xff]
    %v515 = vld [vmem:[#allocation2 + $0x30] sm:$0xff]
    %v516 = vld [vmem:[#allocation2 + $0x38] sm:$0xff]
    %v517 = vld [vmem:[#allocation2 + $0x40] sm:$0xff]
    %v518 = vld [vmem:[#allocation2 + $0x48] sm:$0xff]
    %v519 = vld [vmem:[#allocation2 + $0x50] sm:$0xff]
    %v520 = vld [vmem:[#allocation2 + $0x58] sm:$0xff]
    %v521 = vld [vmem:[#allocation2 + $0x60] sm:$0xff]
    %v522 = vld [vmem:[#allocation2 + $0x68] sm:$0xff]
    %v523 = vld [vmem:[#allocation2 + $0x70] sm:$0xff]
    %v524 = vld [vmem:[#allocation2 + $0x78] sm:$0xff]
    %v525 = vld [vmem:[#allocation9] sm:$0xf]
    %v526 = vld [vmem:[#allocation9 + $0x4] sm:$0xf]
    %v527 = vld [vmem:[#allocation9 + $0x8] sm:$0xf]
    %v528 = vld [vmem:[#allocation9 + $0xc] sm:$0xf]
    %v529 = vld [vmem:[#allocation9 + $0x10] sm:$0xf]
    %v530 = vld [vmem:[#allocation9 + $0x14] sm:$0xf]
    %v531 = vld [vmem:[#allocation9 + $0x18] sm:$0xf]
    %v532 = vld [vmem:[#allocation9 + $0x1c] sm:$0xf]
    %v533 = vld [vmem:[#allocation9 + $0x20] sm:$0xf]
    %v534 = vld [vmem:[#allocation9 + $0x24] sm:$0xf]
    %v535 = vld [vmem:[#allocation9 + $0x28] sm:$0xf]
    %v536 = vld [vmem:[#allocation9 + $0x2c] sm:$0xf]
    %v537 = vld [vmem:[#allocation9 + $0x30] sm:$0xf]
    %v538 = vld [vmem:[#allocation9 + $0x34] sm:$0xf]
    %v539 = vld [vmem:[#allocation9 + $0x38] sm:$0xf]
    %v540 = vld [vmem:[#allocation9 + $0x3c] sm:$0xf]
    %v541 = vld [vmem:[#allocation9 + $0x40] sm:$0xf]
    %v542 = vld [vmem:[#allocation9 + $0x44] sm:$0xf]
    %v543 = vld [vmem:[#allocation9 + $0x48] sm:$0xf]
    %v544 = vld [vmem:[#allocation9 + $0x4c] sm:$0xf]
    %v545 = vld [vmem:[#allocation9 + $0x50] sm:$0xf]
    %v546 = vld [vmem:[#allocation9 + $0x54] sm:$0xf]
    %v547 = vld [vmem:[#allocation9 + $0x58] sm:$0xf]
    %v548 = vld [vmem:[#allocation9 + $0x5c] sm:$0xf]
    %v549 = vld [vmem:[#allocation9 + $0x60] sm:$0xf]
    %v550 = vld [vmem:[#allocation9 + $0x64] sm:$0xf]
    %v551 = vld [vmem:[#allocation9 + $0x68] sm:$0xf]
    %v552 = vld [vmem:[#allocation9 + $0x6c] sm:$0xf]
    %v553 = vld [vmem:[#allocation9 + $0x70] sm:$0xf]
    %v554 = vld [vmem:[#allocation9 + $0x74] sm:$0xf]
    %v555 = vld [vmem:[#allocation9 + $0x78] sm:$0xf]
    %v556 = vld [vmem:[#allocation9 + $0x7c] sm:$0xf]
    %v589 = vunpack.c.l.b16 %v525
    %v590 = vunpack.c.l.b16 %v526
    %v591 = vunpack.c.l.b16 %v527
    %v592 = vunpack.c.l.b16 %v528
    %v593 = vunpack.c.l.b16 %v529
    %v594 = vunpack.c.l.b16 %v530
    %v595 = vunpack.c.l.b16 %v531
    %v596 = vunpack.c.l.b16 %v532
    %v597 = vunpack.c.l.b16 %v533
    %v598 = vunpack.c.l.b16 %v534
    %v599 = vunpack.c.l.b16 %v535
    %v600 = vunpack.c.l.b16 %v536
    %v601 = vunpack.c.l.b16 %v537
    %v602 = vunpack.c.l.b16 %v538
    %v603 = vunpack.c.l.b16 %v539
    %v604 = vunpack.c.l.b16 %v540
    %v605 = vunpack.c.l.b16 %v541
    %v606 = vunpack.c.l.b16 %v542
    %v607 = vunpack.c.l.b16 %v543
    %v608 = vunpack.c.l.b16 %v544
    %v609 = vunpack.c.l.b16 %v545
    %v610 = vunpack.c.l.b16 %v546
    %v611 = vunpack.c.l.b16 %v547
    %v612 = vunpack.c.l.b16 %v548
    %v613 = vunpack.c.l.b16 %v549
    %v614 = vunpack.c.l.b16 %v550
    %v615 = vunpack.c.l.b16 %v551
    %v616 = vunpack.c.l.b16 %v552
    %v617 = vunpack.c.l.b16 %v553
    %v618 = vunpack.c.l.b16 %v554
    %v619 = vunpack.c.l.b16 %v555
    %v620 = vunpack.c.l.b16 %v556
    %v621 = vpack.c.b16 %v590, %v589
    %v622 = vpack.c.b16 %v592, %v591
    %v623 = vpack.c.b16 %v594, %v593
    %v624 = vpack.c.b16 %v596, %v595
    %v625 = vpack.c.b16 %v598, %v597
    %v626 = vpack.c.b16 %v600, %v599
    %v627 = vpack.c.b16 %v602, %v601
    %v628 = vpack.c.b16 %v604, %v603
    %v629 = vpack.c.b16 %v606, %v605
    %v630 = vpack.c.b16 %v608, %v607
    %v631 = vpack.c.b16 %v610, %v609
    %v632 = vpack.c.b16 %v612, %v611
    %v633 = vpack.c.b16 %v614, %v613
    %v634 = vpack.c.b16 %v616, %v615
    %v635 = vpack.c.b16 %v618, %v617
    %v636 = vpack.c.b16 %v620, %v619
    %653 = vmatpush.bf16.msra.mxu0 %v628
    %654 = vmatpush.bf16.msra.mxu0 %v627
    %655 = vmatpush.bf16.msra.mxu0 %v626
    %656 = vmatpush.bf16.msra.mxu0 %v625
    %657 = vmatpush.bf16.msra.mxu0 %v624
    %658 = vmatpush.bf16.msra.mxu0 %v623
    %659 = vmatpush.bf16.msra.mxu0 %v622
    %660 = vmatpush.bf16.msra.mxu0 %v621
    %661 = vmatmul.bf16.gmra.mxu0 %v493
    %v662 = vpop.f32.mrf.mxu0
    %v663 = vadd.f32 0.0, %v662
    %v664 = vpop.f32.mrf.mxu0
    %v665 = vadd.f32 0.0, %v664
    %666 = vmatmul.bf16.gmra.mxu0 %v495
    %v667 = vpop.f32.mrf.mxu0
    %v668 = vadd.f32 0.0, %v667
    %v669 = vpop.f32.mrf.mxu0
    %v670 = vadd.f32 0.0, %v669
    %671 = vmatmul.bf16.gmra.mxu0 %v497
    %v672 = vpop.f32.mrf.mxu0
    %v673 = vadd.f32 0.0, %v672
    %v674 = vpop.f32.mrf.mxu0
    %v675 = vadd.f32 0.0, %v674
    %676 = vmatmul.bf16.gmra.mxu0 %v499
    %v677 = vpop.f32.mrf.mxu0
    %v678 = vadd.f32 0.0, %v677
    %v679 = vpop.f32.mrf.mxu0
    %v680 = vadd.f32 0.0, %v679
    %681 = vmatmul.bf16.gmra.mxu0 %v501
    %v682 = vpop.f32.mrf.mxu0
    %v683 = vadd.f32 0.0, %v682
    %v684 = vpop.f32.mrf.mxu0
    %v685 = vadd.f32 0.0, %v684
    %686 = vmatmul.bf16.gmra.mxu0 %v503
    %v687 = vpop.f32.mrf.mxu0
    %v688 = vadd.f32 0.0, %v687
    %v689 = vpop.f32.mrf.mxu0
    %v690 = vadd.f32 0.0, %v689
    %691 = vmatmul.bf16.gmra.mxu0 %v505
    %v692 = vpop.f32.mrf.mxu0
    %v693 = vadd.f32 0.0, %v692
    %v694 = vpop.f32.mrf.mxu0
    %v695 = vadd.f32 0.0, %v694
    %696 = vmatmul.bf16.gmra.mxu0 %v507
    %v697 = vpop.f32.mrf.mxu0
    %v698 = vadd.f32 0.0, %v697
    %v699 = vpop.f32.mrf.mxu0
    %v700 = vadd.f32 0.0, %v699
    %701 = vdwg.mxu0
    %702 = vmatpush.bf16.msra.mxu0 %v636
    %703 = vmatpush.bf16.msra.mxu0 %v635
    %704 = vmatpush.bf16.msra.mxu0 %v634
    %705 = vmatpush.bf16.msra.mxu0 %v633
    %706 = vmatpush.bf16.msra.mxu0 %v632
    %707 = vmatpush.bf16.msra.mxu0 %v631
    %708 = vmatpush.bf16.msra.mxu0 %v630
    %709 = vmatpush.bf16.msra.mxu0 %v629
    %710 = vmatmul.bf16.gmra.mxu0 %v494
    %v711 = vpop.f32.mrf.mxu0
    %v712 = vadd.f32 %v663, %v711
    %v713 = vpop.f32.mrf.mxu0
    %v714 = vadd.f32 %v665, %v713
    %715 = vmatmul.bf16.gmra.mxu0 %v496
    %v716 = vpop.f32.mrf.mxu0
    %v717 = vadd.f32 %v668, %v716
    %v718 = vpop.f32.mrf.mxu0
    %v719 = vadd.f32 %v670, %v718
    %720 = vmatmul.bf16.gmra.mxu0 %v498
    %v721 = vpop.f32.mrf.mxu0
    %v722 = vadd.f32 %v673, %v721
    %v723 = vpop.f32.mrf.mxu0
    %v724 = vadd.f32 %v675, %v723
    %725 = vmatmul.bf16.gmra.mxu0 %v500
    %v726 = vpop.f32.mrf.mxu0
    %v727 = vadd.f32 %v678, %v726
    %v728 = vpop.f32.mrf.mxu0
    %v729 = vadd.f32 %v680, %v728
    %730 = vmatmul.bf16.gmra.mxu0 %v502
    %v731 = vpop.f32.mrf.mxu0
    %v732 = vadd.f32 %v683, %v731
    %v733 = vpop.f32.mrf.mxu0
    %v734 = vadd.f32 %v685, %v733
    %735 = vmatmul.bf16.gmra.mxu0 %v504
    %v736 = vpop.f32.mrf.mxu0
    %v737 = vadd.f32 %v688, %v736
    %v738 = vpop.f32.mrf.mxu0
    %v739 = vadd.f32 %v690, %v738
    %740 = vmatmul.bf16.gmra.mxu0 %v506
    %v741 = vpop.f32.mrf.mxu0
    %v742 = vadd.f32 %v693, %v741
    %v743 = vpop.f32.mrf.mxu0
    %v744 = vadd.f32 %v695, %v743
    %745 = vmatmul.bf16.gmra.mxu0 %v508
    %v746 = vpop.f32.mrf.mxu0
    %v747 = vadd.f32 %v698, %v746
    %v748 = vpop.f32.mrf.mxu0
    %v749 = vadd.f32 %v700, %v748
    %750 = vdwg.mxu0
    %v751 = vadd.f32 %v509, %v712
    %v752 = vadd.f32 %v510, %v714
    %v753 = vadd.f32 %v511, %v717
    %v754 = vadd.f32 %v512, %v719
    %v755 = vadd.f32 %v513, %v722
    %v756 = vadd.f32 %v514, %v724
    %v757 = vadd.f32 %v515, %v727
    %v758 = vadd.f32 %v516, %v729
    %v759 = vadd.f32 %v517, %v732
    %v760 = vadd.f32 %v518, %v734
    %v761 = vadd.f32 %v519, %v737
    %v762 = vadd.f32 %v520, %v739
    %v763 = vadd.f32 %v521, %v742
    %v764 = vadd.f32 %v522, %v744
    %v765 = vadd.f32 %v523, %v747
    %v766 = vadd.f32 %v524, %v749
    %767 = vst [vmem:[#allocation2] sm:$0xff] %v751
    %768 = vst [vmem:[#allocation2 + $0x8] sm:$0xff] %v752
    %769 = vst [vmem:[#allocation2 + $0x10] sm:$0xff] %v753
    %770 = vst [vmem:[#allocation2 + $0x18] sm:$0xff] %v754
    %771 = vst [vmem:[#allocation2 + $0x20] sm:$0xff] %v755
    %772 = vst [vmem:[#allocation2 + $0x28] sm:$0xff] %v756
    %773 = vst [vmem:[#allocation2 + $0x30] sm:$0xff] %v757
    %774 = vst [vmem:[#allocation2 + $0x38] sm:$0xff] %v758
    %775 = vst [vmem:[#allocation2 + $0x40] sm:$0xff] %v759
    %776 = vst [vmem:[#allocation2 + $0x48] sm:$0xff] %v760
    %777 = vst [vmem:[#allocation2 + $0x50] sm:$0xff] %v761
    %778 = vst [vmem:[#allocation2 + $0x58] sm:$0xff] %v762
    %779 = vst [vmem:[#allocation2 + $0x60] sm:$0xff] %v763
    %780 = vst [vmem:[#allocation2 + $0x68] sm:$0xff] %v764
    %781 = vst [vmem:[#allocation2 + $0x70] sm:$0xff] %v765
    %782 = vst [vmem:[#allocation2 + $0x78] sm:$0xff] %v766
    // Predicated region
    $region42: #{tpu_custom_call.1} parent=1 // pred_check
      %p783 = pneg %p82
    $region43: #{tpu_custom_call.1} parent=1 // pred_check_branch
      %785 = sbr.rel (%p783) target = $region45
    $region44: #{tpu_custom_call.1} parent=1 // pred_region
      %v786 = vld [vmem:[#allocation2] sm:$0xff]
      %v787 = vld [vmem:[#allocation2 + $0x8] sm:$0xff]
      %v788 = vld [vmem:[#allocation2 + $0x10] sm:$0xff]
      %v789 = vld [vmem:[#allocation2 + $0x18] sm:$0xff]
      %v790 = vld [vmem:[#allocation2 + $0x20] sm:$0xff]
      %v791 = vld [vmem:[#allocation2 + $0x28] sm:$0xff]
      %v792 = vld [vmem:[#allocation2 + $0x30] sm:$0xff]
      %v793 = vld [vmem:[#allocation2 + $0x38] sm:$0xff]
      %v794 = vld [vmem:[#allocation2 + $0x40] sm:$0xff]
      %v795 = vld [vmem:[#allocation2 + $0x48] sm:$0xff]
      %v796 = vld [vmem:[#allocation2 + $0x50] sm:$0xff]
      %v797 = vld [vmem:[#allocation2 + $0x58] sm:$0xff]
      %v798 = vld [vmem:[#allocation2 + $0x60] sm:$0xff]
      %v799 = vld [vmem:[#allocation2 + $0x68] sm:$0xff]
      %v800 = vld [vmem:[#allocation2 + $0x70] sm:$0xff]
      %v801 = vld [vmem:[#allocation2 + $0x78] sm:$0xff]
      %v802 = vld [vmem:[%s4] sm:$0x1]
      %v804 = vperm.slane %v802, 0
      %v806 = vadd.f32 %v786, %v804
      %v807 = vadd.f32 %v787, %v804
      %v808 = vadd.f32 %v788, %v804
      %v809 = vadd.f32 %v789, %v804
      %v810 = vadd.f32 %v790, %v804
      %v811 = vadd.f32 %v791, %v804
      %v812 = vadd.f32 %v792, %v804
      %v813 = vadd.f32 %v793, %v804
      %v814 = vadd.f32 %v794, %v804
      %v815 = vadd.f32 %v795, %v804
      %v816 = vadd.f32 %v796, %v804
      %v817 = vadd.f32 %v797, %v804
      %v818 = vadd.f32 %v798, %v804
      %v819 = vadd.f32 %v799, %v804
      %v820 = vadd.f32 %v800, %v804
      %v821 = vadd.f32 %v801, %v804
      %822 = vst [vmem:[#allocation11] sm:$0xff] %v806
      %823 = vst [vmem:[#allocation11 + $0x8] sm:$0xff] %v807
      %824 = vst [vmem:[#allocation11 + $0x10] sm:$0xff] %v808
      %825 = vst [vmem:[#allocation11 + $0x18] sm:$0xff] %v809
      %826 = vst [vmem:[#allocation11 + $0x20] sm:$0xff] %v810
      %827 = vst [vmem:[#allocation11 + $0x28] sm:$0xff] %v811
      %828 = vst [vmem:[#allocation11 + $0x30] sm:$0xff] %v812
      %829 = vst [vmem:[#allocation11 + $0x38] sm:$0xff] %v813
      %830 = vst [vmem:[#allocation11 + $0x40] sm:$0xff] %v814
      %831 = vst [vmem:[#allocation11 + $0x48] sm:$0xff] %v815
      %832 = vst [vmem:[#allocation11 + $0x50] sm:$0xff] %v816
      %833 = vst [vmem:[#allocation11 + $0x58] sm:$0xff] %v817
      %834 = vst [vmem:[#allocation11 + $0x60] sm:$0xff] %v818
      %835 = vst [vmem:[#allocation11 + $0x68] sm:$0xff] %v819
      %836 = vst [vmem:[#allocation11 + $0x70] sm:$0xff] %v820
      %837 = vst [vmem:[#allocation11 + $0x78] sm:$0xff] %v821
    $region45: #{tpu_custom_call.1} parent=1 // pred_fallthru
      _
    // Predicated region
    $region46: #{tpu_custom_call.1} parent=1 // pred_check
      _
    $region47: #{tpu_custom_call.1} parent=1 // pred_check_branch
      %839 = sbr.rel (0) target = $region49
    $region48: #{tpu_custom_call.1} parent=1 // pred_region
      %841 = vsyncadd [#allocation5], 0
      %s842 = sshll.u32 [#allocation11], 4
      %s843 = int_to_ptr.vmem [resolvable:$true] %s842
      %s844 = sshll.u32 %s5, 4
      %s845 = int_to_ptr.hbm [resolvable:$true] %s844
      %850 = dma.vmem_to_hbm [thread:$0]  %s843, 2048, %s845, [#allocation5], 128, 128, 8
    $region49: #{tpu_custom_call.1} parent=1 // pred_fallthru
      _
    // Predicated region
    $region50: #{tpu_custom_call.1} parent=1 // pred_check
      _
    $region51: #{tpu_custom_call.1} parent=1 // pred_check_branch
      %852 = sbr.rel (0) target = $region53
    $region52: #{tpu_custom_call.1} parent=1 // pred_region
      %854 = dma.done [#allocation5], 2048
    $region53: #{tpu_custom_call.1} parent=1 // pred_fallthru
      _
    %855 = vsyncpa [#allocation4], 1
    %856 = vsyncpa [#allocation7], 1
    %857 = vsyncpa [#allocation10], 1
    %858 = vsyncpa [#allocation5], 1

</llo_original>
